<compile_context>
chip_gen: v7x
topology: tpu7x:2x2x1
jax: 0.10.0
libtpu: 0.0.40
codegen_flags: <defaults>
</compile_context>

<pallas_src>
import jax
import jax.numpy as jnp
from jax.experimental import pallas as pl
from jax.experimental.pallas import tpu as pltpu


def _round_up(x, m):
    return ((x + m - 1) // m) * m


def label_embedding_kernel(x_ref, w1_ref, b1_ref, w2_ref, b2_ref, w3_ref,
                           b3_ref, out_ref):
    # fc1 + ReLU: bf16 MXU matmul, f32 accumulation, f32 bias/ReLU.
    x = x_ref[...].astype(jnp.bfloat16)
    h1 = jnp.dot(x, w1_ref[...], preferred_element_type=jnp.float32)
    h1 = jnp.maximum(h1 + b1_ref[...], 0.0)
    # fc2 + ReLU
    h2 = jnp.dot(h1.astype(jnp.bfloat16), w2_ref[...],
                 preferred_element_type=jnp.float32)
    h2 = jnp.maximum(h2 + b2_ref[...], 0.0)
    # fc (no activation)
    out = jnp.dot(h2.astype(jnp.bfloat16), w3_ref[...],
                  preferred_element_type=jnp.float32)
    out_ref[...] = (out + b3_ref[...]).astype(out_ref.dtype)


def label_embedding(labels, params, *, block_m=1024):
    """labels: (B, input_label_num). Returns (B, output_label_num) float32."""
    w1, b1, w2, b2, w3, b3 = (params["w1"], params["b1"], params["w2"],
                              params["b2"], params["w3"], params["b3"])
    labels = labels.astype(jnp.float32)
    B, K = labels.shape
    H = w1.shape[1]
    O = w3.shape[1]

    # Batch tile: multiple of 8 sublanes (f32), capped at block_m, and capped
    # at ceil(B/2) so the grid has >=2 steps when possible (v7x has 2 TCs).
    tm = min(block_m, _round_up(max(pl.cdiv(B, 2), 1), 8))
    grid = (pl.cdiv(B, tm),)

    flops = 2 * B * (K * H + H * H + H * O)
    bytes_accessed = (4 * B * K                       # x read (f32)
                      + 2 * (K * H + H * H + H * O)   # weights (bf16)
                      + 4 * (2 * H + O)               # biases (f32)
                      + 4 * B * O)                    # out write (f32)

    return pl.pallas_call(
        label_embedding_kernel,
        out_shape=jax.ShapeDtypeStruct((B, O), jnp.float32),
        grid=grid,
        in_specs=[
            pl.BlockSpec((tm, K), lambda i: (i, 0)),   # x tile (pipelined)
            pl.BlockSpec((K, H), lambda i: (0, 0)),    # w1 (grid-invariant)
            pl.BlockSpec((1, H), lambda i: (0, 0)),    # b1
            pl.BlockSpec((H, H), lambda i: (0, 0)),    # w2
            pl.BlockSpec((1, H), lambda i: (0, 0)),    # b2
            pl.BlockSpec((H, O), lambda i: (0, 0)),    # w3
            pl.BlockSpec((1, O), lambda i: (0, 0)),    # b3
        ],
        out_specs=pl.BlockSpec((tm, O), lambda i: (i, 0)),
        compiler_params=pltpu.CompilerParams(
            dimension_semantics=("parallel",)),
        cost_estimate=pl.CostEstimate(
            flops=flops, transcendentals=0, bytes_accessed=bytes_accessed),
    )(labels, w1, b1, w2, b2, w3, b3)


def init_params(key, input_label_num, hidden_label_num, output_label_num):
    """PyTorch nn.Linear-style init (U(-1/sqrt(fan_in), +1/sqrt(fan_in))).
    Weights are stored transposed to (in, out) and cast to bf16 (halves the
    weight DMA bytes; matmuls accumulate in f32). Biases stay f32, shaped
    (1, N) for a single sublane-broadcast add per tile."""
    k1, k2, k3, k4, k5, k6 = jax.random.split(key, 6)
    s1 = 1.0 / jnp.sqrt(input_label_num)
    s2 = 1.0 / jnp.sqrt(hidden_label_num)

    w1 = jax.random.uniform(k1, (input_label_num, hidden_label_num),
                            jnp.float32, -s1, s1)
    b1 = jax.random.uniform(k2, (1, hidden_label_num), jnp.float32, -s1, s1)
    w2 = jax.random.uniform(k3, (hidden_label_num, hidden_label_num),
                            jnp.float32, -s2, s2)
    b2 = jax.random.uniform(k4, (1, hidden_label_num), jnp.float32, -s2, s2)
    w3 = jax.random.uniform(k5, (hidden_label_num, output_label_num),
                            jnp.float32, -s2, s2)
    b3 = jax.random.uniform(k6, (1, output_label_num), jnp.float32, -s2, s2)

    return {
        "w1": w1.astype(jnp.bfloat16), "b1": b1,
        "w2": w2.astype(jnp.bfloat16), "b2": b2,
        "w3": w3.astype(jnp.bfloat16), "b3": b3,
    }


def label_embedding_ref(labels, params):
    """Pure-JAX reference mirroring the kernel's numerics exactly
    (bf16 matmul operands, f32 accumulation, f32 bias/ReLU)."""
    f32 = jnp.float32
    x = labels.astype(jnp.bfloat16)
    h1 = jnp.maximum(
        jnp.dot(x, params["w1"], preferred_element_type=f32) + params["b1"], 0.0)
    h2 = jnp.maximum(
        jnp.dot(h1.astype(jnp.bfloat16), params["w2"],
                preferred_element_type=f32) + params["b2"], 0.0)
    return jnp.dot(h2.astype(jnp.bfloat16), params["w3"],
                   preferred_element_type=f32) + params["b3"]


def label_embedding_ref_f32(labels, params):
    """Module-semantics reference: same (bf16-stored) weights, but all
    activations kept in f32 — matches the PyTorch forward up to bf16 weight
    quantization."""
    w1 = params["w1"].astype(jnp.float32)
    w2 = params["w2"].astype(jnp.float32)
    w3 = params["w3"].astype(jnp.float32)
    h1 = jnp.maximum(labels @ w1 + params["b1"], 0.0)
    h2 = jnp.maximum(h1 @ w2 + params["b2"], 0.0)
    return h2 @ w3 + params["b3"]


if __name__ == "__main__":
    batch = 2
    input_label_num = 16
    hidden_label_num = 32
    output_label_num = 8

    key = jax.random.PRNGKey(0)
    k_x, k_p = jax.random.split(key)
    labels = jax.random.normal(k_x, (batch, input_label_num), jnp.float32)
    params = init_params(k_p, input_label_num, hidden_label_num,
                         output_label_num)

    out = jax.block_until_ready(label_embedding(labels, params))
    assert out.shape == (batch, output_label_num)

    # Tight check against a reference that mirrors the kernel's numerics.
    ref = label_embedding_ref(labels, params)
    assert jnp.allclose(out, ref, atol=1e-4, rtol=1e-4), (
        float(jnp.max(jnp.abs(out - ref))))
    # Loose check against the full-f32 forward: bf16 activation quantization
    # is the only deviation from the original module's math.
    ref32 = label_embedding_ref_f32(labels, params)
    assert jnp.allclose(out, ref32, atol=2e-2, rtol=2e-2), (
        float(jnp.max(jnp.abs(out - ref32))))

    print("KERNEL_OK")
</pallas_src>

<mosaic_0001>
module attributes {stable_mosaic.version = 11 : i64} {
  func.func @label_embedding_kernel(%arg0: i32, %arg1: memref<8x16xf32, #tpu.memory_space<vmem>>, %arg2: memref<16x32xbf16, #tpu.memory_space<vmem>>, %arg3: memref<1x32xf32, #tpu.memory_space<vmem>>, %arg4: memref<32x32xbf16, #tpu.memory_space<vmem>>, %arg5: memref<1x32xf32, #tpu.memory_space<vmem>>, %arg6: memref<32x8xbf16, #tpu.memory_space<vmem>>, %arg7: memref<1x8xf32, #tpu.memory_space<vmem>>, %arg8: memref<8x8xf32, #tpu.memory_space<vmem>>) attributes {dimension_semantics = [#tpu.dimension_semantics<parallel>], iteration_bounds = array<i64: 1>, scalar_prefetch = 0 : i64, scratch_operands = 0 : i64, tpu.core_type = #tpu.core_type<tc>, window_params = [{transform_indices = @transform_0, window_bounds = array<i64: 8, 16>}, {pipeline_mode = #tpu.pipeline_mode<synchronous>, transform_indices = @transform_1, window_bounds = array<i64: 16, 32>}, {pipeline_mode = #tpu.pipeline_mode<synchronous>, transform_indices = @transform_2, window_bounds = array<i64: 1, 32>}, {pipeline_mode = #tpu.pipeline_mode<synchronous>, transform_indices = @transform_3, window_bounds = array<i64: 32, 32>}, {pipeline_mode = #tpu.pipeline_mode<synchronous>, transform_indices = @transform_4, window_bounds = array<i64: 1, 32>}, {pipeline_mode = #tpu.pipeline_mode<synchronous>, transform_indices = @transform_5, window_bounds = array<i64: 32, 8>}, {pipeline_mode = #tpu.pipeline_mode<synchronous>, transform_indices = @transform_6, window_bounds = array<i64: 1, 8>}, {transform_indices = @transform_7, window_bounds = array<i64: 8, 8>}]} {
    %c0 = arith.constant 0 : index
    %c0_0 = arith.constant 0 : index
    %0 = vector.load %arg1[%c0, %c0_0] : memref<8x16xf32, #tpu.memory_space<vmem>>, vector<8x16xf32>
    %1 = arith.truncf %0 : vector<8x16xf32> to vector<8x16xbf16>
    %c0_1 = arith.constant 0 : index
    %c0_2 = arith.constant 0 : index
    %2 = vector.load %arg2[%c0_1, %c0_2] : memref<16x32xbf16, #tpu.memory_space<vmem>>, vector<16x32xbf16>
    %cst = arith.constant dense<0.000000e+00> : vector<8x32xf32>
    %3 = tpu.matmul %1, %2, %cst {dimension_numbers = #tpu.dot_dimension_numbers<[1], [0], [0], [1], [0, 0, 1, 1], [], []>} : vector<8x16xbf16>, vector<16x32xbf16>, vector<8x32xf32> -> vector<8x32xf32>
    %c0_3 = arith.constant 0 : index
    %c0_4 = arith.constant 0 : index
    %4 = vector.load %arg3[%c0_3, %c0_4] : memref<1x32xf32, #tpu.memory_space<vmem>>, vector<1x32xf32>
    %5 = vector.broadcast %4 : vector<1x32xf32> to vector<8x32xf32>
    %6 = arith.addf %3, %5 : vector<8x32xf32>
    %cst_5 = arith.constant 0.000000e+00 : f32
    %7 = vector.broadcast %cst_5 : f32 to vector<8x32xf32>
    %8 = arith.maximumf %6, %7 : vector<8x32xf32>
    %9 = arith.truncf %8 : vector<8x32xf32> to vector<8x32xbf16>
    %c0_6 = arith.constant 0 : index
    %c0_7 = arith.constant 0 : index
    %10 = vector.load %arg4[%c0_6, %c0_7] : memref<32x32xbf16, #tpu.memory_space<vmem>>, vector<32x32xbf16>
    %cst_8 = arith.constant dense<0.000000e+00> : vector<8x32xf32>
    %11 = tpu.matmul %9, %10, %cst_8 {dimension_numbers = #tpu.dot_dimension_numbers<[1], [0], [0], [1], [0, 0, 1, 1], [], []>} : vector<8x32xbf16>, vector<32x32xbf16>, vector<8x32xf32> -> vector<8x32xf32>
    %c0_9 = arith.constant 0 : index
    %c0_10 = arith.constant 0 : index
    %12 = vector.load %arg5[%c0_9, %c0_10] : memref<1x32xf32, #tpu.memory_space<vmem>>, vector<1x32xf32>
    %13 = vector.broadcast %12 : vector<1x32xf32> to vector<8x32xf32>
    %14 = arith.addf %11, %13 : vector<8x32xf32>
    %cst_11 = arith.constant 0.000000e+00 : f32
    %15 = vector.broadcast %cst_11 : f32 to vector<8x32xf32>
    %16 = arith.maximumf %14, %15 : vector<8x32xf32>
    %17 = arith.truncf %16 : vector<8x32xf32> to vector<8x32xbf16>
    %c0_12 = arith.constant 0 : index
    %c0_13 = arith.constant 0 : index
    %18 = vector.load %arg6[%c0_12, %c0_13] : memref<32x8xbf16, #tpu.memory_space<vmem>>, vector<32x8xbf16>
    %cst_14 = arith.constant dense<0.000000e+00> : vector<8x8xf32>
    %19 = tpu.matmul %17, %18, %cst_14 {dimension_numbers = #tpu.dot_dimension_numbers<[1], [0], [0], [1], [0, 0, 1, 1], [], []>} : vector<8x32xbf16>, vector<32x8xbf16>, vector<8x8xf32> -> vector<8x8xf32>
    %c0_15 = arith.constant 0 : index
    %c0_16 = arith.constant 0 : index
    %20 = vector.load %arg7[%c0_15, %c0_16] : memref<1x8xf32, #tpu.memory_space<vmem>>, vector<1x8xf32>
    %21 = vector.broadcast %20 : vector<1x8xf32> to vector<8x8xf32>
    %22 = arith.addf %19, %21 : vector<8x8xf32>
    %c0_17 = arith.constant 0 : index
    %c0_18 = arith.constant 0 : index
    %23 = vector.load %arg8[%c0_17, %c0_18] : memref<8x8xf32, #tpu.memory_space<vmem>>, vector<8x8xf32>
    tpu.vector_store %arg8[%c0_17, %c0_18], %22 {strides = array<i32>} : memref<8x8xf32, #tpu.memory_space<vmem>>, vector<8x8xf32>,
    return
  }
  func.func @transform_0(%arg0: i32) -> (i32, i32) {
    %c0_i32 = arith.constant 0 : i32
    %c0_i32_0 = arith.constant 0 : i32
    return %arg0, %c0_i32 : i32, i32
  }
  func.func @transform_1(%arg0: i32) -> (i32, i32) {
    %c0_i32 = arith.constant 0 : i32
    %c0_i32_0 = arith.constant 0 : i32
    %c0_i32_1 = arith.constant 0 : i32
    return %c0_i32, %c0_i32_0 : i32, i32
  }
  func.func @transform_2(%arg0: i32) -> (i32, i32) {
    %c0_i32 = arith.constant 0 : i32
    %c0_i32_0 = arith.constant 0 : i32
    %c0_i32_1 = arith.constant 0 : i32
    return %c0_i32, %c0_i32_0 : i32, i32
  }
  func.func @transform_3(%arg0: i32) -> (i32, i32) {
    %c0_i32 = arith.constant 0 : i32
    %c0_i32_0 = arith.constant 0 : i32
    %c0_i32_1 = arith.constant 0 : i32
    return %c0_i32, %c0_i32_0 : i32, i32
  }
  func.func @transform_4(%arg0: i32) -> (i32, i32) {
    %c0_i32 = arith.constant 0 : i32
    %c0_i32_0 = arith.constant 0 : i32
    %c0_i32_1 = arith.constant 0 : i32
    return %c0_i32, %c0_i32_0 : i32, i32
  }
  func.func @transform_5(%arg0: i32) -> (i32, i32) {
    %c0_i32 = arith.constant 0 : i32
    %c0_i32_0 = arith.constant 0 : i32
    %c0_i32_1 = arith.constant 0 : i32
    return %c0_i32, %c0_i32_0 : i32, i32
  }
  func.func @transform_6(%arg0: i32) -> (i32, i32) {
    %c0_i32 = arith.constant 0 : i32
    %c0_i32_0 = arith.constant 0 : i32
    %c0_i32_1 = arith.constant 0 : i32
    return %c0_i32, %c0_i32_0 : i32, i32
  }
  func.func @transform_7(%arg0: i32) -> (i32, i32) {
    %c0_i32 = arith.constant 0 : i32
    %c0_i32_0 = arith.constant 0 : i32
    return %arg0, %c0_i32 : i32, i32
  }
}

</mosaic_0001>

<llo_original>
// kernel: tpu_custom_call.1
$region0: #{tpu_custom_call.1}
  #allocation0 [shape = 'u32[]', space=smem, size = 0x4, offset = 0x4, fixed_abs, tag = 'smem constant byte address 0x4 - core index']
  #allocation1 [shape = 'u32[144,128]{1,0:T(1,128)}', space=vmem, size = 0x12000, scoped, tag = 'internal scratch']
  %s0 = inlined_call_operand.vmem [shape: f32[2,16], index: 0, kind: input, shape index: {}]
  %s1 = inlined_call_operand.vmem [shape: bf16[16,32], index: 1, kind: input, shape index: {}]
  %s2 = inlined_call_operand.vmem [shape: f32[1,32], index: 2, kind: input, shape index: {}]
  %s3 = inlined_call_operand.vmem [shape: bf16[32,32], index: 3, kind: input, shape index: {}]
  %s4 = inlined_call_operand.vmem [shape: f32[1,32], index: 4, kind: input, shape index: {}]
  %s5 = inlined_call_operand.vmem [shape: bf16[32,8], index: 5, kind: input, shape index: {}]
  %s6 = inlined_call_operand.vmem [shape: f32[1,8], index: 6, kind: input, shape index: {}]
  %s7 = inlined_call_operand.hbm [shape: f32[2,8], index: 7, kind: output, shape index: {}]
  %s8 = sld [smem:[#allocation0]]
  $region38: #{tpu_custom_call.1} parent=0
    _
  %s10 = ssub.s32 1, %s8
  %s11 = scalar_select 0, %s10, %s8
  $region1: #{tpu_custom_call.1} parent=0
    #allocation2 [shape = 'u8[4096]{0}', space=vmem, size = 0x1000, scoped, tag = 'output window, operand 0, single buffered']
    #allocation3 [shape = 's32[1]{0}', space=sflag, size = 0x4, scoped, tag = 'scoped memory for tpu_custom_call.1']
    %12 = vsyncpa [#allocation3], 0
    // Predicated region
    $region2: #{tpu_custom_call.1} parent=1 // pred_check
      _
    $region3: #{tpu_custom_call.1} parent=1 // pred_check_branch
      %14 = sbr.rel (0) target = $region5
    $region4: #{tpu_custom_call.1} parent=1 // pred_region
      _
    $region5: #{tpu_custom_call.1} parent=1 // pred_fallthru
      _
    // Predicated region
    $region6: #{tpu_custom_call.1} parent=1 // pred_check
      _
    $region7: #{tpu_custom_call.1} parent=1 // pred_check_branch
      %16 = sbr.rel (0) target = $region9
    $region8: #{tpu_custom_call.1} parent=1 // pred_region
      _
    $region9: #{tpu_custom_call.1} parent=1 // pred_fallthru
      _
    // Predicated region
    $region10: #{tpu_custom_call.1} parent=1 // pred_check
      _
    $region11: #{tpu_custom_call.1} parent=1 // pred_check_branch
      %18 = sbr.rel (0) target = $region13
    $region12: #{tpu_custom_call.1} parent=1 // pred_region
      _
    $region13: #{tpu_custom_call.1} parent=1 // pred_fallthru
      _
    // Predicated region
    $region14: #{tpu_custom_call.1} parent=1 // pred_check
      _
    $region15: #{tpu_custom_call.1} parent=1 // pred_check_branch
      %20 = sbr.rel (0) target = $region17
    $region16: #{tpu_custom_call.1} parent=1 // pred_region
      _
    $region17: #{tpu_custom_call.1} parent=1 // pred_fallthru
      _
    // Predicated region
    $region18: #{tpu_custom_call.1} parent=1 // pred_check
      _
    $region19: #{tpu_custom_call.1} parent=1 // pred_check_branch
      %22 = sbr.rel (0) target = $region21
    $region20: #{tpu_custom_call.1} parent=1 // pred_region
      _
    $region21: #{tpu_custom_call.1} parent=1 // pred_fallthru
      _
    // Predicated region
    $region22: #{tpu_custom_call.1} parent=1 // pred_check
      _
    $region23: #{tpu_custom_call.1} parent=1 // pred_check_branch
      %24 = sbr.rel (0) target = $region25
    $region24: #{tpu_custom_call.1} parent=1 // pred_region
      _
    $region25: #{tpu_custom_call.1} parent=1 // pred_fallthru
      _
    // Predicated region
    $region26: #{tpu_custom_call.1} parent=1 // pred_check
      _
    $region27: #{tpu_custom_call.1} parent=1 // pred_check_branch
      %26 = sbr.rel (0) target = $region29
    $region28: #{tpu_custom_call.1} parent=1 // pred_region
      _
    $region29: #{tpu_custom_call.1} parent=1 // pred_fallthru
      _
    %v28 = vld [vmem:[%s0] sm:$0xff]
    %v29 = vpack.c.bf16 %v28, %v28
    %v30 = vld [vmem:[%s1] sm:$0xf]
    %v31 = vld [vmem:[%s1 + $0x4] sm:$0xf]
    %v32 = vld [vmem:[%s2] sm:$0x1]
    %v34 = vlaneseq
    %v35 = vshrl.u32 %v34, 7
    %v36 = vsub.s32 0, %v35
    %v37 = vrot.slane %v32, %v36
    %v41 = vunpack.c.l.b16 %v30
    %v42 = vunpack.c.l.b16 %v31
    %v43 = vpack.c.b16 %v42, %v41
    %vm45 = vcmask 130048
    %v47 = vsel %vm45, %v29, 0
    %49 = vmatprep.subr.bf16.mxu0 0
    %50 = vmatpush1.bf16.msra.mxu0 %v43
    %51 = vmatprep.subr.bf16.mxu0 0
    %52 = vmatpush1.bf16.msra.mxu0 0
    %53 = vmatprep.subr.bf16.mxu0 0
    %54 = vmatpush1.bf16.msra.mxu0 0
    %55 = vmatprep.subr.bf16.mxu0 0
    %56 = vmatpush1.bf16.msra.mxu0 0
    %57 = vmatprep.subr.bf16.mxu0 0
    %58 = vmatpush1.bf16.msra.mxu0 0
    %59 = vmatprep.subr.bf16.mxu0 0
    %60 = vmatpush1.bf16.msra.mxu0 0
    %61 = vmatprep.subr.bf16.mxu0 0
    %62 = vmatpush1.bf16.msra.mxu0 0
    %63 = vmatprep.subr.bf16.mxu0 0
    %64 = vmatpush1.bf16.msra.mxu0 0
    %65 = vmatprep.subr.bf16.mxu0 0
    %66 = vmatpush1.bf16.msra.mxu0 0
    %67 = vmatprep.subr.bf16.mxu0 0
    %68 = vmatpush1.bf16.msra.mxu0 0
    %69 = vmatprep.subr.bf16.mxu0 0
    %70 = vmatpush1.bf16.msra.mxu0 0
    %71 = vmatprep.subr.bf16.mxu0 0
    %72 = vmatpush1.bf16.msra.mxu0 0
    %73 = vmatprep.subr.bf16.mxu0 0
    %74 = vmatpush1.bf16.msra.mxu0 0
    %75 = vmatprep.subr.bf16.mxu0 0
    %76 = vmatpush1.bf16.msra.mxu0 0
    %77 = vmatprep.subr.bf16.mxu0 0
    %78 = vmatpush1.bf16.msra.mxu0 0
    %79 = vmatprep.subr.bf16.mxu0 0
    %80 = vmatpush1.bf16.msra.mxu0 0
    %81 = vmatprep.mubr.bf16.mxu0 0
    %82 = vmatmul.mubr.bf16.gmra.mrb[0].mxu0 %v47
    %v83 = vpop.f32.mrb[0].mxu0
    %v84 = vadd.f32 %v37, %v83
    %v85 = vpop.f32.mrb[0].mxu0
    %v86 = vpop.f32.mrb[0].mxu0
    %v87 = vpop.f32.mrb[0].mxu0
    %88 = vdwg.mxu0
    %v89 = vmax.f32 %v84, 0.0
    %v90 = vpack.c.bf16 %v89, %v89
    %v91 = vld [vmem:[%s3] sm:$0xf]
    %v92 = vld [vmem:[%s3 + $0x4] sm:$0xf]
    %v93 = vld [vmem:[%s3 + $0x8] sm:$0xf]
    %v94 = vld [vmem:[%s3 + $0xc] sm:$0xf]
    %v95 = vld [vmem:[%s4] sm:$0x1]
    %v97 = vlaneseq
    %v98 = vshrl.u32 %v97, 7
    %v99 = vsub.s32 0, %v98
    %v100 = vrot.slane %v95, %v99
    %v106 = vunpack.c.l.b16 %v91
    %v107 = vunpack.c.l.b16 %v92
    %v108 = vunpack.c.l.b16 %v93
    %v109 = vunpack.c.l.b16 %v94
    %v110 = vpack.c.b16 %v107, %v106
    %v111 = vpack.c.b16 %v109, %v108
    %vm114 = vcmask 261120
    %v116 = vsel %vm114, %v90, 0
    %118 = vmatprep.subr.bf16.mxu0 0
    %119 = vmatpush1.bf16.msra.mxu0 %v110
    %120 = vmatprep.subr.bf16.mxu0 0
    %121 = vmatpush1.bf16.msra.mxu0 %v111
    %122 = vmatprep.subr.bf16.mxu0 0
    %123 = vmatpush1.bf16.msra.mxu0 0
    %124 = vmatprep.subr.bf16.mxu0 0
    %125 = vmatpush1.bf16.msra.mxu0 0
    %126 = vmatprep.subr.bf16.mxu0 0
    %127 = vmatpush1.bf16.msra.mxu0 0
    %128 = vmatprep.subr.bf16.mxu0 0
    %129 = vmatpush1.bf16.msra.mxu0 0
    %130 = vmatprep.subr.bf16.mxu0 0
    %131 = vmatpush1.bf16.msra.mxu0 0
    %132 = vmatprep.subr.bf16.mxu0 0
    %133 = vmatpush1.bf16.msra.mxu0 0
    %134 = vmatprep.subr.bf16.mxu0 0
    %135 = vmatpush1.bf16.msra.mxu0 0
    %136 = vmatprep.subr.bf16.mxu0 0
    %137 = vmatpush1.bf16.msra.mxu0 0
    %138 = vmatprep.subr.bf16.mxu0 0
    %139 = vmatpush1.bf16.msra.mxu0 0
    %140 = vmatprep.subr.bf16.mxu0 0
    %141 = vmatpush1.bf16.msra.mxu0 0
    %142 = vmatprep.subr.bf16.mxu0 0
    %143 = vmatpush1.bf16.msra.mxu0 0
    %144 = vmatprep.subr.bf16.mxu0 0
    %145 = vmatpush1.bf16.msra.mxu0 0
    %146 = vmatprep.subr.bf16.mxu0 0
    %147 = vmatpush1.bf16.msra.mxu0 0
    %148 = vmatprep.subr.bf16.mxu0 0
    %149 = vmatpush1.bf16.msra.mxu0 0
    %150 = vmatprep.mubr.bf16.mxu0 0
    %151 = vmatmul.mubr.bf16.gmra.mrb[0].mxu0 %v116
    %v152 = vpop.f32.mrb[0].mxu0
    %v153 = vadd.f32 %v100, %v152
    %v154 = vpop.f32.mrb[0].mxu0
    %v155 = vpop.f32.mrb[0].mxu0
    %v156 = vpop.f32.mrb[0].mxu0
    %157 = vdwg.mxu0
    %v158 = vmax.f32 %v153, 0.0
    %v159 = vpack.c.bf16 %v158, %v158
    %v160 = vld [vmem:[%s5] sm:$0xf]
    %v161 = vld [vmem:[%s5 + $0x4] sm:$0xf]
    %v162 = vld [vmem:[%s5 + $0x8] sm:$0xf]
    %v163 = vld [vmem:[%s5 + $0xc] sm:$0xf]
    %v164 = vld [vmem:[%s6] sm:$0x1]
    %v166 = vlaneseq
    %v167 = vshrl.u32 %v166, 7
    %v168 = vsub.s32 0, %v167
    %v169 = vrot.slane %v164, %v168
    %v175 = vunpack.c.l.b16 %v160
    %v176 = vunpack.c.l.b16 %v161
    %v177 = vunpack.c.l.b16 %v162
    %v178 = vunpack.c.l.b16 %v163
    %v179 = vpack.c.b16 %v176, %v175
    %v180 = vpack.c.b16 %v178, %v177
    %v184 = vsel %vm114, %v159, 0
    %186 = vmatprep.subr.bf16.mxu0 0
    %187 = vmatpush1.bf16.msra.mxu0 %v179
    %188 = vmatprep.subr.bf16.mxu0 0
    %189 = vmatpush1.bf16.msra.mxu0 %v180
    %190 = vmatprep.subr.bf16.mxu0 0
    %191 = vmatpush1.bf16.msra.mxu0 0
    %192 = vmatprep.subr.bf16.mxu0 0
    %193 = vmatpush1.bf16.msra.mxu0 0
    %194 = vmatprep.subr.bf16.mxu0 0
    %195 = vmatpush1.bf16.msra.mxu0 0
    %196 = vmatprep.subr.bf16.mxu0 0
    %197 = vmatpush1.bf16.msra.mxu0 0
    %198 = vmatprep.subr.bf16.mxu0 0
    %199 = vmatpush1.bf16.msra.mxu0 0
    %200 = vmatprep.subr.bf16.mxu0 0
    %201 = vmatpush1.bf16.msra.mxu0 0
    %202 = vmatprep.subr.bf16.mxu0 0
    %203 = vmatpush1.bf16.msra.mxu0 0
    %204 = vmatprep.subr.bf16.mxu0 0
    %205 = vmatpush1.bf16.msra.mxu0 0
    %206 = vmatprep.subr.bf16.mxu0 0
    %207 = vmatpush1.bf16.msra.mxu0 0
    %208 = vmatprep.subr.bf16.mxu0 0
    %209 = vmatpush1.bf16.msra.mxu0 0
    %210 = vmatprep.subr.bf16.mxu0 0
    %211 = vmatpush1.bf16.msra.mxu0 0
    %212 = vmatprep.subr.bf16.mxu0 0
    %213 = vmatpush1.bf16.msra.mxu0 0
    %214 = vmatprep.subr.bf16.mxu0 0
    %215 = vmatpush1.bf16.msra.mxu0 0
    %216 = vmatprep.subr.bf16.mxu0 0
    %217 = vmatpush1.bf16.msra.mxu0 0
    %218 = vmatprep.mubr.bf16.mxu0 0
    %219 = vmatmul.mubr.bf16.gmra.mrb[0].mxu0 %v184
    %v220 = vpop.f32.mrb[0].mxu0
    %v221 = vadd.f32 %v169, %v220
    %v222 = vpop.f32.mrb[0].mxu0
    %v223 = vpop.f32.mrb[0].mxu0
    %v224 = vpop.f32.mrb[0].mxu0
    %225 = vdwg.mxu0
    %vm226 = vcmask 64512
    %227 = vst.msk [vmem:[#allocation2] sm:$0xff] %vm226, %v221
    // Predicated region
    $region30: #{tpu_custom_call.1} parent=1 // pred_check
      _
    $region31: #{tpu_custom_call.1} parent=1 // pred_check_branch
      %229 = sbr.rel (0) target = $region33
    $region32: #{tpu_custom_call.1} parent=1 // pred_region
      %s231 = ssub.s32 128, 32
      %232 = vsyncadd [#allocation3], %s231
      %s233 = sshll.u32 [#allocation2], 4
      %s234 = int_to_ptr.vmem [resolvable:$true] %s233
      %239 = dma.vmem_to_hbm [thread:$0]  %s234, 32, %s7, [#allocation3], 32, 32, 2
    $region33: #{tpu_custom_call.1} parent=1 // pred_fallthru
      _
    // Predicated region
    $region34: #{tpu_custom_call.1} parent=1 // pred_check
      _
    $region35: #{tpu_custom_call.1} parent=1 // pred_check_branch
      %241 = sbr.rel (0) target = $region37
    $region36: #{tpu_custom_call.1} parent=1 // pred_region
      %242 = dma.done [#allocation3], 128
    $region37: #{tpu_custom_call.1} parent=1 // pred_fallthru
      _
    %243 = vsyncpa [#allocation3], 1

</llo_original>
